<compile_context>
chip_gen: v5e
topology: v5e:2x2
jax: 0.10.0
libtpu: 0.0.40
codegen_flags: <defaults>
</compile_context>

<pallas_src>
import functools

import jax
import jax.numpy as jnp
from jax.experimental import pallas as pl
from jax.experimental.pallas import tpu as pltpu


# ----------------------------------------------------------------------------
# Helpers
# ----------------------------------------------------------------------------
def _rup(x, m):
    return (x + m - 1) // m * m


def _pad2d(a, rows, cols):
    return jnp.pad(a, ((0, rows - a.shape[0]), (0, cols - a.shape[1])))


# ----------------------------------------------------------------------------
# Pallas kernel: fully fused MLP (all layers in one kernel)
# ----------------------------------------------------------------------------
def _fused_mlp_kernel(*refs, n_layers, split_first, slope=0.01):
    """refs = (activation inputs..., (w, b) per layer..., out_ref).

    split_first=True : inputs are (u, it) and layer0 params are (W0u, W0i, b0)
                       -> x = u @ W0u + it @ W0i + b0   (no concat needed).
    split_first=False: inputs are (x,) and layer0 params are (W0, b0).
    Accumulation is f32 (preferred_element_type); bias add + leaky_relu in f32.
    """
    out_ref = refs[-1]
    if split_first:
        u_ref, it_ref = refs[0], refs[1]
        wb = refs[2:-1]
        w0u, w0i, b0 = wb[0][...], wb[1][...], wb[2][...]
        x = (jnp.dot(u_ref[...].astype(w0u.dtype), w0u,
                     preferred_element_type=jnp.float32)
             + jnp.dot(it_ref[...].astype(w0i.dtype), w0i,
                       preferred_element_type=jnp.float32)
             + b0)
        k = 3
    else:
        x_ref = refs[0]
        wb = refs[1:-1]
        w0, b0 = wb[0][...], wb[1][...]
        x = jnp.dot(x_ref[...].astype(w0.dtype), w0,
                    preferred_element_type=jnp.float32) + b0
        k = 2

    if n_layers > 1:
        x = jnp.where(x > 0, x, slope * x)      # F.leaky_relu, slope 0.01

    for e in range(1, n_layers):                # static unrolled layer loop
        w = wb[k][...]
        b = wb[k + 1][...]
        k += 2
        x = jnp.dot(x.astype(w.dtype), w,
                    preferred_element_type=jnp.float32) + b
        if e < n_layers - 1:
            x = jnp.where(x > 0, x, slope * x)

    out_ref[...] = x.astype(out_ref.dtype)


# ----------------------------------------------------------------------------
# Wrapper: padding, tiling, single pallas_call for the whole MLP
# ----------------------------------------------------------------------------
def fused_mlp(acts, weights, biases, *, split_first, block_b=256,
              compute_dtype=jnp.float32):
    """acts: list of (B, K) f32 activation inputs (1 or 2 entries).
    weights[e]: (din_e, dout_e) f32, biases[e]: (dout_e,) f32."""
    n_layers = len(weights)
    B = acts[0].shape[0]
    out_dim = weights[-1].shape[1]

    # --- batch tiling: multiple of 8 sublanes, TB tile, "parallel" grid axis
    bp8 = _rup(max(B, 1), 8)
    tb = min(bp8, block_b)
    Bp = _rup(B, tb)

    # --- lane-dense padded feature dims (multiples of 128)
    dout_p = [_rup(w.shape[1], 128) for w in weights]

    kernel_inputs = []
    in_specs = []

    def act_spec(feat):
        return pl.BlockSpec((tb, feat), lambda i: (i, 0))

    def param_spec(shape):
        return pl.BlockSpec(shape, lambda i: (0, 0))   # weight stays resident

    if split_first:
        emb_dim = acts[0].shape[1]
        emb_p = _rup(emb_dim, 128)
        u_p = _pad2d(acts[0], Bp, emb_p)
        it_p = _pad2d(acts[1], Bp, emb_p)
        w0 = weights[0]
        w0u = _pad2d(w0[:emb_dim], emb_p, dout_p[0]).astype(compute_dtype)
        w0i = _pad2d(w0[emb_dim:], emb_p, dout_p[0]).astype(compute_dtype)
        b0 = _pad2d(biases[0].reshape(1, -1), 1, dout_p[0])
        kernel_inputs += [u_p, it_p, w0u, w0i, b0]
        in_specs += [act_spec(emb_p), act_spec(emb_p),
                     param_spec(w0u.shape), param_spec(w0i.shape),
                     param_spec(b0.shape)]
        n_act_inputs = 2
        flops_row = 2 * (2 * emb_p) * dout_p[0]
    else:
        din0_p = _rup(acts[0].shape[1], 128)
        x_p = _pad2d(acts[0], Bp, din0_p)
        w0 = _pad2d(weights[0], din0_p, dout_p[0]).astype(compute_dtype)
        b0 = _pad2d(biases[0].reshape(1, -1), 1, dout_p[0])
        kernel_inputs += [x_p, w0, b0]
        in_specs += [act_spec(din0_p), param_spec(w0.shape), param_spec(b0.shape)]
        n_act_inputs = 1
        flops_row = 2 * din0_p * dout_p[0]

    for e in range(1, n_layers):
        din_p = dout_p[e - 1]
        w = _pad2d(weights[e], din_p, dout_p[e]).astype(compute_dtype)
        b = _pad2d(biases[e].reshape(1, -1), 1, dout_p[e])
        kernel_inputs += [w, b]
        in_specs += [param_spec(w.shape), param_spec(b.shape)]
        flops_row += 2 * din_p * dout_p[e]

    out_p = dout_p[-1]
    grid = (Bp // tb,)

    act_bytes = sum(int(a.size) * a.dtype.itemsize
                    for a in kernel_inputs[:n_act_inputs])
    param_bytes = sum(int(a.size) * a.dtype.itemsize
                      for a in kernel_inputs[n_act_inputs:])
    cost = pl.CostEstimate(
        flops=int(flops_row) * int(Bp),
        transcendentals=0,
        bytes_accessed=int(act_bytes + param_bytes + Bp * out_p * 4),
    )

    kernel = functools.partial(_fused_mlp_kernel,
                               n_layers=n_layers,
                               split_first=split_first)

    out_padded = pl.pallas_call(
        kernel,
        out_shape=jax.ShapeDtypeStruct((Bp, out_p), jnp.float32),
        grid=grid,
        in_specs=in_specs,
        out_specs=pl.BlockSpec((tb, out_p), lambda i: (i, 0)),
        compiler_params=pltpu.CompilerParams(
            dimension_semantics=("parallel",)),
        cost_estimate=cost,
    )(*kernel_inputs)

    return out_padded[:B, :out_dim]


# ----------------------------------------------------------------------------
# Discriminator forward (embedding gather in XLA, fused MLP in Pallas)
# ----------------------------------------------------------------------------
def discriminator_forward(params, user, item=None, *, compute_dtype=jnp.float32):
    """user, item: int32 arrays of shape (B, 1) (matching PyTorch .squeeze(1))."""
    if params["emb_dim"]:
        u = jnp.take(params["user_emb"], user[:, 0], axis=0)    # (B, emb_dim)
        it = jnp.take(params["item_emb"], item[:, 0], axis=0)   # (B, emb_dim)
        acts = [u, it]
        split_first = True
    else:
        acts = [jnp.take(params["user_emb"], user[:, 0], axis=0)]  # (B, hidden)
        split_first = False
    return fused_mlp(acts, params["weights"], params["biases"],
                     split_first=split_first, compute_dtype=compute_dtype)


# ----------------------------------------------------------------------------
# Deterministic parameter construction (mirrors module __init__ shapes)
# ----------------------------------------------------------------------------
def make_params(key, inp_dim, out_dim, hidden, layers, emb_dim):
    keys = jax.random.split(key, 2 * layers + 2)
    dims = []
    for e in range(layers):
        din = inp_dim if e == 0 else hidden
        dout = out_dim if e == layers - 1 else hidden
        dims.append((din, dout))
    weights, biases = [], []
    for e, (din, dout) in enumerate(dims):
        bound = 1.0 / jnp.sqrt(din)
        w = jax.random.uniform(keys[2 * e], (din, dout), jnp.float32,
                               minval=-bound, maxval=bound)
        b = jax.random.uniform(keys[2 * e + 1], (dout,), jnp.float32,
                               minval=-bound, maxval=bound)
        weights.append(w)
        biases.append(b)

    params = {"weights": weights, "biases": biases, "emb_dim": emb_dim}
    if emb_dim:
        params["item_emb"] = jax.random.normal(keys[-2], (9724 + 1, emb_dim),
                                               jnp.float32)
        params["user_emb"] = jax.random.normal(keys[-1], (610 + 1, emb_dim),
                                               jnp.float32)
    else:
        params["user_emb"] = jax.random.normal(keys[-1], (610 + 1, hidden),
                                               jnp.float32)
    return params


# ----------------------------------------------------------------------------
# Pure-JAX reference for correctness check
# ----------------------------------------------------------------------------
def reference_forward(params, user, item=None):
    if params["emb_dim"]:
        u = jnp.take(params["user_emb"], user[:, 0], axis=0)
        it = jnp.take(params["item_emb"], item[:, 0], axis=0)
        x = jnp.concatenate([u, it], axis=1)
    else:
        x = jnp.take(params["user_emb"], user[:, 0], axis=0)
    n = len(params["weights"])
    for e in range(n):
        x = x @ params["weights"][e] + params["biases"][e]
        if e < n - 1:
            x = jnp.where(x > 0, x, 0.01 * x)
    return x


if __name__ == "__main__":
    key = jax.random.PRNGKey(0)
    kp, kp2, ku, ki = jax.random.split(key, 4)

    # --- Path 1: emb_dim > 0 (concat of user/item embeddings) ---------------
    emb_dim = 16
    inp_dim = 2 * emb_dim
    hidden = 32
    out_dim = 8
    layers = 3
    batch = 4

    params = make_params(kp, inp_dim, out_dim, hidden, layers, emb_dim)
    user = jax.random.randint(ku, (batch, 1), 0, 611, dtype=jnp.int32)
    item = jax.random.randint(ki, (batch, 1), 0, 9725, dtype=jnp.int32)

    out = discriminator_forward(params, user, item)
    out = jax.block_until_ready(out)
    ref = reference_forward(params, user, item)
    assert out.shape == (batch, out_dim)
    assert jnp.allclose(out, ref, atol=1e-5, rtol=1e-5), (out, ref)

    # --- Path 2: emb_dim == 0 (user embedding only) --------------------------
    params0 = make_params(kp2, hidden, out_dim, hidden, 2, 0)
    out0 = discriminator_forward(params0, user)
    out0 = jax.block_until_ready(out0)
    ref0 = reference_forward(params0, user)
    assert out0.shape == (batch, out_dim)
    assert jnp.allclose(out0, ref0, atol=1e-5, rtol=1e-5), (out0, ref0)

    print("KERNEL_OK")
</pallas_src>

<mosaic_0001>
module attributes {stable_mosaic.version = 11 : i64} {
  func.func @_fused_mlp_kernel(%arg0: i32, %arg1: memref<8x128xf32, #tpu.memory_space<vmem>>, %arg2: memref<8x128xf32, #tpu.memory_space<vmem>>, %arg3: memref<128x128xf32, #tpu.memory_space<vmem>>, %arg4: memref<128x128xf32, #tpu.memory_space<vmem>>, %arg5: memref<1x128xf32, #tpu.memory_space<vmem>>, %arg6: memref<128x128xf32, #tpu.memory_space<vmem>>, %arg7: memref<1x128xf32, #tpu.memory_space<vmem>>, %arg8: memref<128x128xf32, #tpu.memory_space<vmem>>, %arg9: memref<1x128xf32, #tpu.memory_space<vmem>>, %arg10: memref<8x128xf32, #tpu.memory_space<vmem>>) attributes {dimension_semantics = [#tpu.dimension_semantics<parallel>], iteration_bounds = array<i64: 1>, scalar_prefetch = 0 : i64, scratch_operands = 0 : i64, tpu.core_type = #tpu.core_type<tc>, window_params = [{transform_indices = @transform_0, window_bounds = array<i64: 8, 128>}, {transform_indices = @transform_1, window_bounds = array<i64: 8, 128>}, {pipeline_mode = #tpu.pipeline_mode<synchronous>, transform_indices = @transform_2, window_bounds = array<i64: 128, 128>}, {pipeline_mode = #tpu.pipeline_mode<synchronous>, transform_indices = @transform_3, window_bounds = array<i64: 128, 128>}, {pipeline_mode = #tpu.pipeline_mode<synchronous>, transform_indices = @transform_4, window_bounds = array<i64: 1, 128>}, {pipeline_mode = #tpu.pipeline_mode<synchronous>, transform_indices = @transform_5, window_bounds = array<i64: 128, 128>}, {pipeline_mode = #tpu.pipeline_mode<synchronous>, transform_indices = @transform_6, window_bounds = array<i64: 1, 128>}, {pipeline_mode = #tpu.pipeline_mode<synchronous>, transform_indices = @transform_7, window_bounds = array<i64: 128, 128>}, {pipeline_mode = #tpu.pipeline_mode<synchronous>, transform_indices = @transform_8, window_bounds = array<i64: 1, 128>}, {transform_indices = @transform_9, window_bounds = array<i64: 8, 128>}]} {
    %c0 = arith.constant 0 : index
    %c0_0 = arith.constant 0 : index
    %0 = vector.load %arg3[%c0, %c0_0] : memref<128x128xf32, #tpu.memory_space<vmem>>, vector<128x128xf32>
    %c0_1 = arith.constant 0 : index
    %c0_2 = arith.constant 0 : index
    %1 = vector.load %arg4[%c0_1, %c0_2] : memref<128x128xf32, #tpu.memory_space<vmem>>, vector<128x128xf32>
    %c0_3 = arith.constant 0 : index
    %c0_4 = arith.constant 0 : index
    %2 = vector.load %arg5[%c0_3, %c0_4] : memref<1x128xf32, #tpu.memory_space<vmem>>, vector<1x128xf32>
    %c0_5 = arith.constant 0 : index
    %c0_6 = arith.constant 0 : index
    %3 = vector.load %arg1[%c0_5, %c0_6] : memref<8x128xf32, #tpu.memory_space<vmem>>, vector<8x128xf32>
    %cst = arith.constant dense<0.000000e+00> : vector<8x128xf32>
    %4 = tpu.matmul %3, %0, %cst {dimension_numbers = #tpu.dot_dimension_numbers<[1], [0], [0], [1], [0, 0, 1, 1], [], []>} : vector<8x128xf32>, vector<128x128xf32>, vector<8x128xf32> -> vector<8x128xf32>
    %c0_7 = arith.constant 0 : index
    %c0_8 = arith.constant 0 : index
    %5 = vector.load %arg2[%c0_7, %c0_8] : memref<8x128xf32, #tpu.memory_space<vmem>>, vector<8x128xf32>
    %cst_9 = arith.constant dense<0.000000e+00> : vector<8x128xf32>
    %6 = tpu.matmul %5, %1, %cst_9 {dimension_numbers = #tpu.dot_dimension_numbers<[1], [0], [0], [1], [0, 0, 1, 1], [], []>} : vector<8x128xf32>, vector<128x128xf32>, vector<8x128xf32> -> vector<8x128xf32>
    %7 = arith.addf %4, %6 : vector<8x128xf32>
    %8 = vector.broadcast %2 : vector<1x128xf32> to vector<8x128xf32>
    %9 = arith.addf %7, %8 : vector<8x128xf32>
    %cst_10 = arith.constant 0.000000e+00 : f32
    %10 = vector.broadcast %cst_10 : f32 to vector<8x128xf32>
    %11 = arith.cmpf ogt, %9, %10 : vector<8x128xf32>
    %cst_11 = arith.constant 0.00999999977 : f32
    %12 = vector.broadcast %cst_11 : f32 to vector<8x128xf32>
    %13 = arith.mulf %12, %9 : vector<8x128xf32>
    %14 = arith.select %11, %9, %13 : vector<8x128xi1>, vector<8x128xf32>
    %c0_12 = arith.constant 0 : index
    %c0_13 = arith.constant 0 : index
    %15 = vector.load %arg6[%c0_12, %c0_13] : memref<128x128xf32, #tpu.memory_space<vmem>>, vector<128x128xf32>
    %c0_14 = arith.constant 0 : index
    %c0_15 = arith.constant 0 : index
    %16 = vector.load %arg7[%c0_14, %c0_15] : memref<1x128xf32, #tpu.memory_space<vmem>>, vector<1x128xf32>
    %cst_16 = arith.constant dense<0.000000e+00> : vector<8x128xf32>
    %17 = tpu.matmul %14, %15, %cst_16 {dimension_numbers = #tpu.dot_dimension_numbers<[1], [0], [0], [1], [0, 0, 1, 1], [], []>} : vector<8x128xf32>, vector<128x128xf32>, vector<8x128xf32> -> vector<8x128xf32>
    %18 = vector.broadcast %16 : vector<1x128xf32> to vector<8x128xf32>
    %19 = arith.addf %17, %18 : vector<8x128xf32>
    %cst_17 = arith.constant 0.000000e+00 : f32
    %20 = vector.broadcast %cst_17 : f32 to vector<8x128xf32>
    %21 = arith.cmpf ogt, %19, %20 : vector<8x128xf32>
    %cst_18 = arith.constant 0.00999999977 : f32
    %22 = vector.broadcast %cst_18 : f32 to vector<8x128xf32>
    %23 = arith.mulf %22, %19 : vector<8x128xf32>
    %24 = arith.select %21, %19, %23 : vector<8x128xi1>, vector<8x128xf32>
    %c0_19 = arith.constant 0 : index
    %c0_20 = arith.constant 0 : index
    %25 = vector.load %arg8[%c0_19, %c0_20] : memref<128x128xf32, #tpu.memory_space<vmem>>, vector<128x128xf32>
    %c0_21 = arith.constant 0 : index
    %c0_22 = arith.constant 0 : index
    %26 = vector.load %arg9[%c0_21, %c0_22] : memref<1x128xf32, #tpu.memory_space<vmem>>, vector<1x128xf32>
    %cst_23 = arith.constant dense<0.000000e+00> : vector<8x128xf32>
    %27 = tpu.matmul %24, %25, %cst_23 {dimension_numbers = #tpu.dot_dimension_numbers<[1], [0], [0], [1], [0, 0, 1, 1], [], []>} : vector<8x128xf32>, vector<128x128xf32>, vector<8x128xf32> -> vector<8x128xf32>
    %28 = vector.broadcast %26 : vector<1x128xf32> to vector<8x128xf32>
    %29 = arith.addf %27, %28 : vector<8x128xf32>
    %c0_24 = arith.constant 0 : index
    %c0_25 = arith.constant 0 : index
    %30 = vector.load %arg10[%c0_24, %c0_25] : memref<8x128xf32, #tpu.memory_space<vmem>>, vector<8x128xf32>
    tpu.vector_store %arg10[%c0_24, %c0_25], %29 {strides = array<i32>} : memref<8x128xf32, #tpu.memory_space<vmem>>, vector<8x128xf32>,
    return
  }
  func.func @transform_0(%arg0: i32) -> (i32, i32) {
    %c0_i32 = arith.constant 0 : i32
    %c0_i32_0 = arith.constant 0 : i32
    return %arg0, %c0_i32 : i32, i32
  }
  func.func @transform_1(%arg0: i32) -> (i32, i32) {
    %c0_i32 = arith.constant 0 : i32
    %c0_i32_0 = arith.constant 0 : i32
    return %arg0, %c0_i32 : i32, i32
  }
  func.func @transform_2(%arg0: i32) -> (i32, i32) {
    %c0_i32 = arith.constant 0 : i32
    %c0_i32_0 = arith.constant 0 : i32
    %c0_i32_1 = arith.constant 0 : i32
    return %c0_i32, %c0_i32_0 : i32, i32
  }
  func.func @transform_3(%arg0: i32) -> (i32, i32) {
    %c0_i32 = arith.constant 0 : i32
    %c0_i32_0 = arith.constant 0 : i32
    %c0_i32_1 = arith.constant 0 : i32
    return %c0_i32, %c0_i32_0 : i32, i32
  }
  func.func @transform_4(%arg0: i32) -> (i32, i32) {
    %c0_i32 = arith.constant 0 : i32
    %c0_i32_0 = arith.constant 0 : i32
    %c0_i32_1 = arith.constant 0 : i32
    return %c0_i32, %c0_i32_0 : i32, i32
  }
  func.func @transform_5(%arg0: i32) -> (i32, i32) {
    %c0_i32 = arith.constant 0 : i32
    %c0_i32_0 = arith.constant 0 : i32
    %c0_i32_1 = arith.constant 0 : i32
    return %c0_i32, %c0_i32_0 : i32, i32
  }
  func.func @transform_6(%arg0: i32) -> (i32, i32) {
    %c0_i32 = arith.constant 0 : i32
    %c0_i32_0 = arith.constant 0 : i32
    %c0_i32_1 = arith.constant 0 : i32
    return %c0_i32, %c0_i32_0 : i32, i32
  }
  func.func @transform_7(%arg0: i32) -> (i32, i32) {
    %c0_i32 = arith.constant 0 : i32
    %c0_i32_0 = arith.constant 0 : i32
    %c0_i32_1 = arith.constant 0 : i32
    return %c0_i32, %c0_i32_0 : i32, i32
  }
  func.func @transform_8(%arg0: i32) -> (i32, i32) {
    %c0_i32 = arith.constant 0 : i32
    %c0_i32_0 = arith.constant 0 : i32
    %c0_i32_1 = arith.constant 0 : i32
    return %c0_i32, %c0_i32_0 : i32, i32
  }
  func.func @transform_9(%arg0: i32) -> (i32, i32) {
    %c0_i32 = arith.constant 0 : i32
    %c0_i32_0 = arith.constant 0 : i32
    return %arg0, %c0_i32 : i32, i32
  }
}

</mosaic_0001>

<llo_original>
// kernel: tpu_custom_call.1
$region0: #{tpu_custom_call.1}
  #allocation0 [shape = 'u32[]', space=smem, size = 0x4, offset = 0x4, fixed_abs, tag = 'smem constant byte address 0x4 - core index']
  #allocation1 [shape = 'u32[72,128]{1,0:T(1,128)}', space=vmem, size = 0x9000, scoped, tag = 'internal scratch']
  %s0 = inlined_call_operand.hbm [shape: f32[8,128], index: 0, kind: input, shape index: {}]
  %s1 = inlined_call_operand.hbm [shape: f32[8,128], index: 1, kind: input, shape index: {}]
  %s2 = inlined_call_operand.hbm [shape: f32[128,128], index: 2, kind: input, shape index: {}]
  %s3 = inlined_call_operand.hbm [shape: f32[128,128], index: 3, kind: input, shape index: {}]
  %s4 = inlined_call_operand.vmem [shape: f32[1,128], index: 4, kind: input, shape index: {}]
  %s5 = inlined_call_operand.hbm [shape: f32[128,128], index: 5, kind: input, shape index: {}]
  %s6 = inlined_call_operand.vmem [shape: f32[1,128], index: 6, kind: input, shape index: {}]
  %s7 = inlined_call_operand.hbm [shape: f32[128,128], index: 7, kind: input, shape index: {}]
  %s8 = inlined_call_operand.vmem [shape: f32[1,128], index: 8, kind: input, shape index: {}]
  %s9 = inlined_call_operand.hbm [shape: f32[8,128], index: 9, kind: output, shape index: {}]
  %s10 = sld [smem:[#allocation0]]
  $region70: #{tpu_custom_call.1} parent=0
    _
  %s12 = ssub.s32 1, %s10
  %s13 = scalar_select 0, %s12, %s10
  $region1: #{tpu_custom_call.1} parent=0
    #allocation2 [shape = 'u8[4096]{0}', space=vmem, size = 0x1000, scoped, tag = 'input window, operand 0, single buffered']
    #allocation3 [shape = 's32[1]{0}', space=sflag, size = 0x4, scoped, tag = 'scoped memory for tpu_custom_call.1']
    #allocation4 [shape = 's32[1]{0}', space=sflag, size = 0x4, scoped, tag = 'scoped memory for tpu_custom_call.1']
    #allocation5 [shape = 'u8[4096]{0}', space=vmem, size = 0x1000, scoped, tag = 'input window, operand 1, single buffered']
    #allocation6 [shape = 's32[1]{0}', space=sflag, size = 0x4, scoped, tag = 'scoped memory for tpu_custom_call.1']
    #allocation7 [shape = 'u8[65536]{0}', space=vmem, size = 0x10000, scoped, tag = 'input window, operand 2, single buffered']
    #allocation8 [shape = 'u8[65536]{0}', space=vmem, size = 0x10000, scoped, tag = 'input window, operand 3, single buffered']
    #allocation9 [shape = 's32[1]{0}', space=sflag, size = 0x4, scoped, tag = 'scoped memory for tpu_custom_call.1']
    #allocation10 [shape = 'u8[65536]{0}', space=vmem, size = 0x10000, scoped, tag = 'input window, operand 5, single buffered']
    #allocation11 [shape = 'u8[65536]{0}', space=vmem, size = 0x10000, scoped, tag = 'input window, operand 7, single buffered']
    #allocation12 [shape = 's32[1]{0}', space=sflag, size = 0x4, scoped, tag = 'scoped memory for tpu_custom_call.1']
    #allocation13 [shape = 'u8[4096]{0}', space=vmem, size = 0x1000, scoped, tag = 'output window, operand 0, single buffered']
    %14 = vsyncpa [#allocation3], 0
    %15 = vsyncpa [#allocation6], 0
    %16 = vsyncpa [#allocation9], 0
    %17 = vsyncpa [#allocation12], 0
    %18 = vsyncpa [#allocation4], 0
    // Predicated region
    $region2: #{tpu_custom_call.1} parent=1 // pred_check
      _
    $region3: #{tpu_custom_call.1} parent=1 // pred_check_branch
      %20 = sbr.rel (0) target = $region5
    $region4: #{tpu_custom_call.1} parent=1 // pred_region
      %22 = vsyncadd [#allocation3], 0
      %s24 = sshll.u32 %s0, 4
      %s25 = int_to_ptr.hbm [resolvable:$true] %s24
      %s26 = sshll.u32 [#allocation2], 4
      %s27 = int_to_ptr.vmem [resolvable:$true] %s26
      %29 = dma.hbm_to_vmem [thread:$0]  %s25, 128, %s27, [#allocation3]
    $region5: #{tpu_custom_call.1} parent=1 // pred_fallthru
      _
    // Predicated region
    $region6: #{tpu_custom_call.1} parent=1 // pred_check
      _
    $region7: #{tpu_custom_call.1} parent=1 // pred_check_branch
      %31 = sbr.rel (0) target = $region9
    $region8: #{tpu_custom_call.1} parent=1 // pred_region
      %33 = vsyncadd [#allocation6], 0
      %s35 = sshll.u32 %s1, 4
      %s36 = int_to_ptr.hbm [resolvable:$true] %s35
      %s37 = sshll.u32 [#allocation5], 4
      %s38 = int_to_ptr.vmem [resolvable:$true] %s37
      %40 = dma.hbm_to_vmem [thread:$0]  %s36, 128, %s38, [#allocation6]
    $region9: #{tpu_custom_call.1} parent=1 // pred_fallthru
      _
    // Predicated region
    $region10: #{tpu_custom_call.1} parent=1 // pred_check
      _
    $region11: #{tpu_custom_call.1} parent=1 // pred_check_branch
      %42 = sbr.rel (0) target = $region13
    $region12: #{tpu_custom_call.1} parent=1 // pred_region
      %44 = vsyncadd [#allocation6], 0
      %s45 = sshll.u32 %s2, 4
      %s46 = int_to_ptr.hbm [resolvable:$true] %s45
      %s47 = sshll.u32 [#allocation7], 4
      %s48 = int_to_ptr.vmem [resolvable:$true] %s47
      %53 = dma.hbm_to_vmem [thread:$0]  %s46, 2048, %s48, [#allocation6], 128, 128, 8
    $region13: #{tpu_custom_call.1} parent=1 // pred_fallthru
      _
    // Predicated region
    $region14: #{tpu_custom_call.1} parent=1 // pred_check
      _
    $region15: #{tpu_custom_call.1} parent=1 // pred_check_branch
      %55 = sbr.rel (0) target = $region17
    $region16: #{tpu_custom_call.1} parent=1 // pred_region
      %57 = vsyncadd [#allocation9], 0
      %s58 = sshll.u32 %s3, 4
      %s59 = int_to_ptr.hbm [resolvable:$true] %s58
      %s60 = sshll.u32 [#allocation8], 4
      %s61 = int_to_ptr.vmem [resolvable:$true] %s60
      %66 = dma.hbm_to_vmem [thread:$0]  %s59, 2048, %s61, [#allocation9], 128, 128, 8
    $region17: #{tpu_custom_call.1} parent=1 // pred_fallthru
      _
    // Predicated region
    $region18: #{tpu_custom_call.1} parent=1 // pred_check
      _
    $region19: #{tpu_custom_call.1} parent=1 // pred_check_branch
      %68 = sbr.rel (0) target = $region21
    $region20: #{tpu_custom_call.1} parent=1 // pred_region
      _
    $region21: #{tpu_custom_call.1} parent=1 // pred_fallthru
      _
    // Predicated region
    $region22: #{tpu_custom_call.1} parent=1 // pred_check
      _
    $region23: #{tpu_custom_call.1} parent=1 // pred_check_branch
      %70 = sbr.rel (0) target = $region25
    $region24: #{tpu_custom_call.1} parent=1 // pred_region
      %72 = vsyncadd [#allocation9], 0
      %s73 = sshll.u32 %s5, 4
      %s74 = int_to_ptr.hbm [resolvable:$true] %s73
      %s75 = sshll.u32 [#allocation10], 4
      %s76 = int_to_ptr.vmem [resolvable:$true] %s75
      %81 = dma.hbm_to_vmem [thread:$0]  %s74, 2048, %s76, [#allocation9], 128, 128, 8
    $region25: #{tpu_custom_call.1} parent=1 // pred_fallthru
      _
    // Predicated region
    $region26: #{tpu_custom_call.1} parent=1 // pred_check
      _
    $region27: #{tpu_custom_call.1} parent=1 // pred_check_branch
      %83 = sbr.rel (0) target = $region29
    $region28: #{tpu_custom_call.1} parent=1 // pred_region
      _
    $region29: #{tpu_custom_call.1} parent=1 // pred_fallthru
      _
    // Predicated region
    $region30: #{tpu_custom_call.1} parent=1 // pred_check
      _
    $region31: #{tpu_custom_call.1} parent=1 // pred_check_branch
      %85 = sbr.rel (0) target = $region33
    $region32: #{tpu_custom_call.1} parent=1 // pred_region
      %87 = vsyncadd [#allocation12], 0
      %s88 = sshll.u32 %s7, 4
      %s89 = int_to_ptr.hbm [resolvable:$true] %s88
      %s90 = sshll.u32 [#allocation11], 4
      %s91 = int_to_ptr.vmem [resolvable:$true] %s90
      %96 = dma.hbm_to_vmem [thread:$0]  %s89, 2048, %s91, [#allocation12], 128, 128, 8
    $region33: #{tpu_custom_call.1} parent=1 // pred_fallthru
      _
    // Predicated region
    $region34: #{tpu_custom_call.1} parent=1 // pred_check
      _
    $region35: #{tpu_custom_call.1} parent=1 // pred_check_branch
      %98 = sbr.rel (0) target = $region37
    $region36: #{tpu_custom_call.1} parent=1 // pred_region
      _
    $region37: #{tpu_custom_call.1} parent=1 // pred_fallthru
      _
    // Predicated region
    $region38: #{tpu_custom_call.1} parent=1 // pred_check
      _
    $region39: #{tpu_custom_call.1} parent=1 // pred_check_branch
      %100 = sbr.rel (0) target = $region41
    $region40: #{tpu_custom_call.1} parent=1 // pred_region
      %102 = dma.done [#allocation3], 128
    $region41: #{tpu_custom_call.1} parent=1 // pred_fallthru
      _
    // Predicated region
    $region42: #{tpu_custom_call.1} parent=1 // pred_check
      _
    $region43: #{tpu_custom_call.1} parent=1 // pred_check_branch
      %104 = sbr.rel (0) target = $region45
    $region44: #{tpu_custom_call.1} parent=1 // pred_region
      %106 = dma.done [#allocation6], 128
    $region45: #{tpu_custom_call.1} parent=1 // pred_fallthru
      _
    // Predicated region
    $region46: #{tpu_custom_call.1} parent=1 // pred_check
      _
    $region47: #{tpu_custom_call.1} parent=1 // pred_check_branch
      %108 = sbr.rel (0) target = $region49
    $region48: #{tpu_custom_call.1} parent=1 // pred_region
      %110 = dma.done [#allocation6], 2048
    $region49: #{tpu_custom_call.1} parent=1 // pred_fallthru
      _
    // Predicated region
    $region50: #{tpu_custom_call.1} parent=1 // pred_check
      _
    $region51: #{tpu_custom_call.1} parent=1 // pred_check_branch
      %112 = sbr.rel (0) target = $region53
    $region52: #{tpu_custom_call.1} parent=1 // pred_region
      %114 = dma.done [#allocation9], 2048
    $region53: #{tpu_custom_call.1} parent=1 // pred_fallthru
      _
    // Predicated region
    $region54: #{tpu_custom_call.1} parent=1 // pred_check
      _
    $region55: #{tpu_custom_call.1} parent=1 // pred_check_branch
      %116 = sbr.rel (0) target = $region57
    $region56: #{tpu_custom_call.1} parent=1 // pred_region
      %118 = dma.done [#allocation9], 2048
    $region57: #{tpu_custom_call.1} parent=1 // pred_fallthru
      _
    // Predicated region
    $region58: #{tpu_custom_call.1} parent=1 // pred_check
      _
    $region59: #{tpu_custom_call.1} parent=1 // pred_check_branch
      %120 = sbr.rel (0) target = $region61
    $region60: #{tpu_custom_call.1} parent=1 // pred_region
      %122 = dma.done [#allocation12], 2048
    $region61: #{tpu_custom_call.1} parent=1 // pred_fallthru
      _
    %v123 = vld [vmem:[#allocation7] sm:$0xff]
    %v124 = vld [vmem:[#allocation7 + $0x8] sm:$0xff]
    %v125 = vld [vmem:[#allocation7 + $0x10] sm:$0xff]
    %v126 = vld [vmem:[#allocation7 + $0x18] sm:$0xff]
    %v127 = vld [vmem:[#allocation7 + $0x20] sm:$0xff]
    %v128 = vld [vmem:[#allocation7 + $0x28] sm:$0xff]
    %v129 = vld [vmem:[#allocation7 + $0x30] sm:$0xff]
    %v130 = vld [vmem:[#allocation7 + $0x38] sm:$0xff]
    %v131 = vld [vmem:[#allocation7 + $0x40] sm:$0xff]
    %v132 = vld [vmem:[#allocation7 + $0x48] sm:$0xff]
    %v133 = vld [vmem:[#allocation7 + $0x50] sm:$0xff]
    %v134 = vld [vmem:[#allocation7 + $0x58] sm:$0xff]
    %v135 = vld [vmem:[#allocation7 + $0x60] sm:$0xff]
    %v136 = vld [vmem:[#allocation7 + $0x68] sm:$0xff]
    %v137 = vld [vmem:[#allocation7 + $0x70] sm:$0xff]
    %v138 = vld [vmem:[#allocation7 + $0x78] sm:$0xff]
    %v139 = vld [vmem:[#allocation8] sm:$0xff]
    %v140 = vld [vmem:[#allocation8 + $0x8] sm:$0xff]
    %v141 = vld [vmem:[#allocation8 + $0x10] sm:$0xff]
    %v142 = vld [vmem:[#allocation8 + $0x18] sm:$0xff]
    %v143 = vld [vmem:[#allocation8 + $0x20] sm:$0xff]
    %v144 = vld [vmem:[#allocation8 + $0x28] sm:$0xff]
    %v145 = vld [vmem:[#allocation8 + $0x30] sm:$0xff]
    %v146 = vld [vmem:[#allocation8 + $0x38] sm:$0xff]
    %v147 = vld [vmem:[#allocation8 + $0x40] sm:$0xff]
    %v148 = vld [vmem:[#allocation8 + $0x48] sm:$0xff]
    %v149 = vld [vmem:[#allocation8 + $0x50] sm:$0xff]
    %v150 = vld [vmem:[#allocation8 + $0x58] sm:$0xff]
    %v151 = vld [vmem:[#allocation8 + $0x60] sm:$0xff]
    %v152 = vld [vmem:[#allocation8 + $0x68] sm:$0xff]
    %v153 = vld [vmem:[#allocation8 + $0x70] sm:$0xff]
    %v154 = vld [vmem:[#allocation8 + $0x78] sm:$0xff]
    %v155 = vld [vmem:[%s4] sm:$0x1]
    %v156 = vld [vmem:[#allocation2] sm:$0xff]
    %v157 = vld [vmem:[#allocation5] sm:$0xff]
    %158 = vmatpush.msra.mxu0 %v154
    %159 = vmatpush.msra.mxu0 %v153
    %160 = vmatpush.msra.mxu0 %v152
    %161 = vmatpush.msra.mxu0 %v151
    %162 = vmatpush.msra.mxu0 %v150
    %163 = vmatpush.msra.mxu0 %v149
    %164 = vmatpush.msra.mxu0 %v148
    %165 = vmatpush.msra.mxu0 %v147
    %166 = vmatpush.msra.mxu0 %v146
    %167 = vmatpush.msra.mxu0 %v145
    %168 = vmatpush.msra.mxu0 %v144
    %169 = vmatpush.msra.mxu0 %v143
    %170 = vmatpush.msra.mxu0 %v142
    %171 = vmatpush.msra.mxu0 %v141
    %172 = vmatpush.msra.mxu0 %v140
    %173 = vmatpush.msra.mxu0 %v139
    %174 = vmatmul.f32.gmra.mxu0 %v157
    %v175 = vpop.f32.mrf.mxu0
    %v176 = vadd.f32 0.0, %v175
    %177 = vdwg.mxu0
    %178 = vmatpush.msra.mxu0 %v138
    %179 = vmatpush.msra.mxu0 %v137
    %180 = vmatpush.msra.mxu0 %v136
    %181 = vmatpush.msra.mxu0 %v135
    %182 = vmatpush.msra.mxu0 %v134
    %183 = vmatpush.msra.mxu0 %v133
    %184 = vmatpush.msra.mxu0 %v132
    %185 = vmatpush.msra.mxu0 %v131
    %186 = vmatpush.msra.mxu0 %v130
    %187 = vmatpush.msra.mxu0 %v129
    %188 = vmatpush.msra.mxu0 %v128
    %189 = vmatpush.msra.mxu0 %v127
    %190 = vmatpush.msra.mxu0 %v126
    %191 = vmatpush.msra.mxu0 %v125
    %192 = vmatpush.msra.mxu0 %v124
    %193 = vmatpush.msra.mxu0 %v123
    %194 = vmatmul.f32.gmra.mxu0 %v156
    %v195 = vpop.f32.mrf.mxu0
    %v196 = vadd.f32 %v176, %v195
    %197 = vdwg.mxu0
    %v199 = vperm.slane %v155, 0
    %v201 = vadd.f32 %v196, %v199
    %vm202 = vcmp.gt.f32.partialorder %v201, 0.0
    %v203 = vmul.f32 %v201, 0.01
    %v204 = vsel %vm202, %v201, %v203
    %v205 = vld [vmem:[#allocation10] sm:$0xff]
    %v206 = vld [vmem:[#allocation10 + $0x8] sm:$0xff]
    %v207 = vld [vmem:[#allocation10 + $0x10] sm:$0xff]
    %v208 = vld [vmem:[#allocation10 + $0x18] sm:$0xff]
    %v209 = vld [vmem:[#allocation10 + $0x20] sm:$0xff]
    %v210 = vld [vmem:[#allocation10 + $0x28] sm:$0xff]
    %v211 = vld [vmem:[#allocation10 + $0x30] sm:$0xff]
    %v212 = vld [vmem:[#allocation10 + $0x38] sm:$0xff]
    %v213 = vld [vmem:[#allocation10 + $0x40] sm:$0xff]
    %v214 = vld [vmem:[#allocation10 + $0x48] sm:$0xff]
    %v215 = vld [vmem:[#allocation10 + $0x50] sm:$0xff]
    %v216 = vld [vmem:[#allocation10 + $0x58] sm:$0xff]
    %v217 = vld [vmem:[#allocation10 + $0x60] sm:$0xff]
    %v218 = vld [vmem:[#allocation10 + $0x68] sm:$0xff]
    %v219 = vld [vmem:[#allocation10 + $0x70] sm:$0xff]
    %v220 = vld [vmem:[#allocation10 + $0x78] sm:$0xff]
    %v221 = vld [vmem:[%s6] sm:$0x1]
    %v223 = vperm.slane %v221, 0
    %225 = vmatpush.msra.mxu0 %v220
    %226 = vmatpush.msra.mxu0 %v219
    %227 = vmatpush.msra.mxu0 %v218
    %228 = vmatpush.msra.mxu0 %v217
    %229 = vmatpush.msra.mxu0 %v216
    %230 = vmatpush.msra.mxu0 %v215
    %231 = vmatpush.msra.mxu0 %v214
    %232 = vmatpush.msra.mxu0 %v213
    %233 = vmatpush.msra.mxu0 %v212
    %234 = vmatpush.msra.mxu0 %v211
    %235 = vmatpush.msra.mxu0 %v210
    %236 = vmatpush.msra.mxu0 %v209
    %237 = vmatpush.msra.mxu0 %v208
    %238 = vmatpush.msra.mxu0 %v207
    %239 = vmatpush.msra.mxu0 %v206
    %240 = vmatpush.msra.mxu0 %v205
    %241 = vmatmul.f32.gmra.mxu0 %v204
    %v242 = vpop.f32.mrf.mxu0
    %v243 = vadd.f32 %v223, %v242
    %244 = vdwg.mxu0
    %vm245 = vcmp.gt.f32.partialorder %v243, 0.0
    %v246 = vmul.f32 %v243, 0.01
    %v247 = vsel %vm245, %v243, %v246
    %v248 = vld [vmem:[#allocation11] sm:$0xff]
    %v249 = vld [vmem:[#allocation11 + $0x8] sm:$0xff]
    %v250 = vld [vmem:[#allocation11 + $0x10] sm:$0xff]
    %v251 = vld [vmem:[#allocation11 + $0x18] sm:$0xff]
    %v252 = vld [vmem:[#allocation11 + $0x20] sm:$0xff]
    %v253 = vld [vmem:[#allocation11 + $0x28] sm:$0xff]
    %v254 = vld [vmem:[#allocation11 + $0x30] sm:$0xff]
    %v255 = vld [vmem:[#allocation11 + $0x38] sm:$0xff]
    %v256 = vld [vmem:[#allocation11 + $0x40] sm:$0xff]
    %v257 = vld [vmem:[#allocation11 + $0x48] sm:$0xff]
    %v258 = vld [vmem:[#allocation11 + $0x50] sm:$0xff]
    %v259 = vld [vmem:[#allocation11 + $0x58] sm:$0xff]
    %v260 = vld [vmem:[#allocation11 + $0x60] sm:$0xff]
    %v261 = vld [vmem:[#allocation11 + $0x68] sm:$0xff]
    %v262 = vld [vmem:[#allocation11 + $0x70] sm:$0xff]
    %v263 = vld [vmem:[#allocation11 + $0x78] sm:$0xff]
    %v264 = vld [vmem:[%s8] sm:$0x1]
    %v266 = vperm.slane %v264, 0
    %268 = vmatpush.msra.mxu0 %v263
    %269 = vmatpush.msra.mxu0 %v262
    %270 = vmatpush.msra.mxu0 %v261
    %271 = vmatpush.msra.mxu0 %v260
    %272 = vmatpush.msra.mxu0 %v259
    %273 = vmatpush.msra.mxu0 %v258
    %274 = vmatpush.msra.mxu0 %v257
    %275 = vmatpush.msra.mxu0 %v256
    %276 = vmatpush.msra.mxu0 %v255
    %277 = vmatpush.msra.mxu0 %v254
    %278 = vmatpush.msra.mxu0 %v253
    %279 = vmatpush.msra.mxu0 %v252
    %280 = vmatpush.msra.mxu0 %v251
    %281 = vmatpush.msra.mxu0 %v250
    %282 = vmatpush.msra.mxu0 %v249
    %283 = vmatpush.msra.mxu0 %v248
    %284 = vmatmul.f32.gmra.mxu0 %v247
    %v285 = vpop.f32.mrf.mxu0
    %v286 = vadd.f32 %v266, %v285
    %287 = vdwg.mxu0
    %288 = vst [vmem:[#allocation13] sm:$0xff] %v286
    // Predicated region
    $region62: #{tpu_custom_call.1} parent=1 // pred_check
      _
    $region63: #{tpu_custom_call.1} parent=1 // pred_check_branch
      %290 = sbr.rel (0) target = $region65
    $region64: #{tpu_custom_call.1} parent=1 // pred_region
      %292 = vsyncadd [#allocation4], 0
      %s294 = sshll.u32 [#allocation13], 4
      %s295 = int_to_ptr.vmem [resolvable:$true] %s294
      %s296 = sshll.u32 %s9, 4
      %s297 = int_to_ptr.hbm [resolvable:$true] %s296
      %299 = dma.vmem_to_hbm [thread:$0]  %s295, 128, %s297, [#allocation4]
    $region65: #{tpu_custom_call.1} parent=1 // pred_fallthru
      _
    // Predicated region
    $region66: #{tpu_custom_call.1} parent=1 // pred_check
      _
    $region67: #{tpu_custom_call.1} parent=1 // pred_check_branch
      %301 = sbr.rel (0) target = $region69
    $region68: #{tpu_custom_call.1} parent=1 // pred_region
      %303 = dma.done [#allocation4], 128
    $region69: #{tpu_custom_call.1} parent=1 // pred_fallthru
      _
    %304 = vsyncpa [#allocation3], 1
    %305 = vsyncpa [#allocation6], 1
    %306 = vsyncpa [#allocation9], 1
    %307 = vsyncpa [#allocation12], 1
    %308 = vsyncpa [#allocation4], 1

</llo_original>
